<compile_context>
chip_gen: v7x
topology: tpu7x:2x2x1
jax: 0.10.0
libtpu: 0.0.40
codegen_flags: <defaults>
</compile_context>

<pallas_src>
import jax
import jax.numpy as jnp
from jax.experimental import pallas as pl
from jax.experimental.pallas import tpu as pltpu

LRELU = 0.1


def _make_kernel(H, W, HW, CP, L):
    """L = NB*HW lanes per block; CP = channel count padded to a sublane tile."""
    TAPS = [(sy, sx) for sy in (-1, 0, 1) for sx in (-1, 0, 1)]

    def kernel(x_ref, w1_ref, w2_ref, o_ref):
        # x_ref : (CP, L)   channels on sublanes, batch*space on lanes
        # w*_ref: (CP, 9*CP) weights as (Cout_pad, tap*CP + cin_pad); bias folded in
        # o_ref : (CP, L)
        x = x_ref[...].astype(jnp.float32)

        # Per-lane local position inside its sample (same for every sample) and the
        # derived validity masks for +-1 row / column taps.  Computed once, reused
        # by both convs.  These masks also zero any roll wrap-around / cross-sample
        # positions (those are exactly the out-of-bounds taps).
        lane = jax.lax.broadcasted_iota(jnp.int32, (1, L), 1)
        q = lane % HW                      # index within one H*W image
        col = q % W
        not_left = col >= 1                # valid when sampling column c-1 (sx=-1)
        not_right = col <= (W - 2)         # valid when sampling column c+1 (sx=+1)
        row_up_ok = q >= W                 # valid when sampling row r-1   (sy=-1)
        row_dn_ok = q < (HW - W)           # valid when sampling row r+1   (sy=+1)

        def conv3x3(inp, wf):
            pieces = []
            for sy, sx in TAPS:
                d = sy * W + sx
                # s[:, p] = inp[:, p + d]  (cyclic; wrap positions masked below)
                s = inp if d == 0 else pltpu.roll(inp, shift=(-d) % L, axis=1)
                m = None
                if sy == -1:
                    m = row_up_ok
                elif sy == 1:
                    m = row_dn_ok
                if sx == -1:
                    m = not_left if m is None else jnp.logical_and(m, not_left)
                elif sx == 1:
                    m = not_right if m is None else jnp.logical_and(m, not_right)
                if m is not None:
                    s = jnp.where(m, s, 0.0)
                pieces.append(s)
            # 9 full (CP, L) sublane tiles -> tile-aligned stack, no repacking.
            patches = jnp.concatenate(pieces, axis=0)            # (9*CP, L)
            # Bias rides along via the constant-ones channel row inside patches.
            return jnp.dot(wf, patches, preferred_element_type=jnp.float32)

        z = conv3x3(x, w1_ref[...])
        z = jnp.where(z >= 0, z, LRELU * z)                      # LeakyReLU(0.1)
        y = conv3x3(z, w2_ref[...])
        o_ref[...] = y.astype(o_ref.dtype)

    return kernel


def _pack_weights(w, b, C, CP, carry_ones):
    """(Cout,Cin,3,3)+(Cout,) -> (CP, 9*CP) with bias folded into the ones column."""
    wt = jnp.transpose(w, (2, 3, 0, 1)).reshape(9, C, C).astype(jnp.float32)  # (tap,o,i)
    wf = jnp.zeros((CP, 9, CP), jnp.float32)
    wf = wf.at[:C, :, :C].set(jnp.transpose(wt, (1, 0, 2)))      # (o, tap, i)
    wf = wf.at[:C, 4, C].set(b.astype(jnp.float32))              # bias -> center tap, ones row
    if carry_ones:
        # Padded output channel C reproduces the ones row (LeakyReLU(1)=1), so the
        # next conv can fold its own bias the same way.
        wf = wf.at[C, 4, C].set(1.0)
    return wf.reshape(CP, 9 * CP)


def basic_block(x_nchw, w1, b1, w2, b2, *, max_nb=64):
    """x: (N, C, H, W); w: (Cout, Cin, 3, 3) PyTorch layout; b: (C,)."""
    N, C, H, W = x_nchw.shape
    HW = H * W
    CP = ((C + 1 + 7) // 8) * 8            # channels + ones row, padded to 8

    # Grid: at most 2 big batch chunks (feeds both v7x TensorCores, amortizes the
    # ~0.35us/step overhead); chunks capped so VMEM intermediates stay small.
    steps = min(N, 2)
    NB = -(-N // steps)
    if NB > max_nb:
        NB = max_nb
        steps = -(-N // NB)
    if steps > 1 and (NB * HW) % 128 != 0:  # lane blocks must stay 128-aligned
        steps, NB = 1, N
    N_pad = steps * NB
    L_blk = NB * HW
    L_tot = N_pad * HW

    # Tiny one-time relayout (few KiB here): (N,C,HW) -> (CP, N*HW) with channels on
    # sublanes, batch folded onto lanes, a constant-ones row for the bias fold, and
    # zero rows padding channels to a full sublane tile.
    x_cn = jnp.transpose(x_nchw.reshape(N, C, HW), (1, 0, 2)).astype(jnp.float32)
    if N_pad > N:
        x_cn = jnp.pad(x_cn, ((0, 0), (0, N_pad - N), (0, 0)))
    rows = [x_cn.reshape(C, L_tot), jnp.ones((1, L_tot), jnp.float32)]
    if CP - C - 1 > 0:
        rows.append(jnp.zeros((CP - C - 1, L_tot), jnp.float32))
    xp = jnp.concatenate(rows, axis=0)                           # (CP, L_tot)

    w1f = _pack_weights(w1, b1, C, CP, carry_ones=True)
    w2f = _pack_weights(w2, b2, C, CP, carry_ones=False)

    kernel = _make_kernel(H, W, HW, CP, L_blk)

    out = pl.pallas_call(
        kernel,
        out_shape=jax.ShapeDtypeStruct((CP, L_tot), jnp.float32),
        grid_spec=pltpu.PrefetchScalarGridSpec(
            num_scalar_prefetch=0,
            grid=(steps,),
            in_specs=[
                pl.BlockSpec((CP, L_blk), lambda i: (0, i)),
                pl.BlockSpec((CP, 9 * CP), lambda i: (0, 0)),
                pl.BlockSpec((CP, 9 * CP), lambda i: (0, 0)),
            ],
            out_specs=pl.BlockSpec((CP, L_blk), lambda i: (0, i)),
        ),
        compiler_params=pltpu.CompilerParams(
            dimension_semantics=("parallel",)),
    )(xp, w1f, w2f)

    out = out.reshape(CP, N_pad, HW)[:C, :N]                     # drop pad rows/samples
    return jnp.transpose(out, (1, 0, 2)).reshape(N, C, H, W).astype(x_nchw.dtype)


def basic_block_ref(x, w1, b1, w2, b2):
    """Pure-JAX reference (NCHW, same semantics as the PyTorch module)."""
    def conv(x, w, b):
        y = jax.lax.conv_general_dilated(
            x, w, window_strides=(1, 1), padding=((1, 1), (1, 1)),
            dimension_numbers=("NCHW", "OIHW", "NCHW"))
        return y + b.reshape(1, -1, 1, 1)
    r = conv(x, w1, b1)
    r = jnp.where(r >= 0, r, LRELU * r)
    return conv(r, w2, b2)


if __name__ == "__main__":
    N, C, H, W = 2, 4, 16, 16
    key = jax.random.PRNGKey(0)
    kx, kw1, kb1, kw2, kb2 = jax.random.split(key, 5)

    x = jax.random.normal(kx, (N, C, H, W), jnp.float32)
    w1 = jax.random.normal(kw1, (C, C, 3, 3), jnp.float32) * 0.1
    b1 = jax.random.normal(kb1, (C,), jnp.float32) * 0.1
    w2 = jax.random.normal(kw2, (C, C, 3, 3), jnp.float32) * 0.1
    b2 = jax.random.normal(kb2, (C,), jnp.float32) * 0.1

    out = jax.block_until_ready(basic_block(x, w1, b1, w2, b2))
    ref = jax.block_until_ready(basic_block_ref(x, w1, b1, w2, b2))

    assert out.shape == (N, C, H, W)
    assert jnp.allclose(out, ref, atol=1e-4, rtol=1e-4), "mismatch vs reference"

    print("KERNEL_OK")
</pallas_src>

<mosaic_0001>
module attributes {stable_mosaic.version = 11 : i64} {
  func.func @kernel(%arg0: i32, %arg1: memref<8x256xf32, #tpu.memory_space<vmem>>, %arg2: memref<8x72xf32, #tpu.memory_space<vmem>>, %arg3: memref<8x72xf32, #tpu.memory_space<vmem>>, %arg4: memref<8x256xf32, #tpu.memory_space<vmem>>) attributes {dimension_semantics = [#tpu.dimension_semantics<parallel>], iteration_bounds = array<i64: 2>, scalar_prefetch = 0 : i64, scratch_operands = 0 : i64, tpu.core_type = #tpu.core_type<tc>, window_params = [{transform_indices = @transform_0, window_bounds = array<i64: 8, 256>}, {pipeline_mode = #tpu.pipeline_mode<synchronous>, transform_indices = @transform_1, window_bounds = array<i64: 8, 72>}, {pipeline_mode = #tpu.pipeline_mode<synchronous>, transform_indices = @transform_2, window_bounds = array<i64: 8, 72>}, {transform_indices = @transform_3, window_bounds = array<i64: 8, 256>}]} {
    %c0 = arith.constant 0 : index
    %c0_0 = arith.constant 0 : index
    %0 = vector.load %arg1[%c0, %c0_0] : memref<8x256xf32, #tpu.memory_space<vmem>>, vector<8x256xf32>
    %1 = tpu.iota {dimensions = array<i32: 1>} : vector<1x256xi32>
    %c256_i32 = arith.constant 256 : i32
    %c0_i32 = arith.constant 0 : i32
    %2 = arith.cmpi eq, %c256_i32, %c0_i32 : i32
    %c1_i32 = arith.constant 1 : i32
    %3 = arith.select %2, %c1_i32, %c256_i32 : i32
    %4 = vector.broadcast %3 : i32 to vector<1x256xi32>
    %5 = arith.remsi %1, %4 : vector<1x256xi32>
    %c0_i32_1 = arith.constant 0 : i32
    %6 = vector.broadcast %c0_i32_1 : i32 to vector<1x256xi32>
    %7 = arith.cmpi ne, %5, %6 : vector<1x256xi32>
    %c0_i32_2 = arith.constant 0 : i32
    %8 = vector.broadcast %c0_i32_2 : i32 to vector<1x256xi32>
    %9 = arith.cmpi slt, %5, %8 : vector<1x256xi32>
    %c0_i32_3 = arith.constant 0 : i32
    %10 = arith.cmpi slt, %3, %c0_i32_3 : i32
    %11 = vector.broadcast %10 : i1 to vector<1x256xi1>
    %12 = vector.broadcast %11 : vector<1x256xi1> to vector<1x256xi1>
    %13 = arith.xori %9, %12 : vector<1x256xi1>
    %14 = arith.andi %13, %7 : vector<1x256xi1>
    %15 = vector.broadcast %3 : i32 to vector<1x256xi32>
    %16 = arith.addi %5, %15 : vector<1x256xi32>
    %17 = arith.select %14, %16, %5 : vector<1x256xi1>, vector<1x256xi32>
    %c16_i32 = arith.constant 16 : i32
    %c0_i32_4 = arith.constant 0 : i32
    %18 = arith.cmpi eq, %c16_i32, %c0_i32_4 : i32
    %c1_i32_5 = arith.constant 1 : i32
    %19 = arith.select %18, %c1_i32_5, %c16_i32 : i32
    %20 = vector.broadcast %19 : i32 to vector<1x256xi32>
    %21 = arith.remsi %17, %20 : vector<1x256xi32>
    %c0_i32_6 = arith.constant 0 : i32
    %22 = vector.broadcast %c0_i32_6 : i32 to vector<1x256xi32>
    %23 = arith.cmpi ne, %21, %22 : vector<1x256xi32>
    %c0_i32_7 = arith.constant 0 : i32
    %24 = vector.broadcast %c0_i32_7 : i32 to vector<1x256xi32>
    %25 = arith.cmpi slt, %21, %24 : vector<1x256xi32>
    %c0_i32_8 = arith.constant 0 : i32
    %26 = arith.cmpi slt, %19, %c0_i32_8 : i32
    %27 = vector.broadcast %26 : i1 to vector<1x256xi1>
    %28 = vector.broadcast %27 : vector<1x256xi1> to vector<1x256xi1>
    %29 = arith.xori %25, %28 : vector<1x256xi1>
    %30 = arith.andi %29, %23 : vector<1x256xi1>
    %31 = vector.broadcast %19 : i32 to vector<1x256xi32>
    %32 = arith.addi %21, %31 : vector<1x256xi32>
    %33 = arith.select %30, %32, %21 : vector<1x256xi1>, vector<1x256xi32>
    %c1_i32_9 = arith.constant 1 : i32
    %34 = vector.broadcast %c1_i32_9 : i32 to vector<1x256xi32>
    %35 = arith.cmpi sge, %33, %34 : vector<1x256xi32>
    %c14_i32 = arith.constant 14 : i32
    %36 = vector.broadcast %c14_i32 : i32 to vector<1x256xi32>
    %37 = arith.cmpi sle, %33, %36 : vector<1x256xi32>
    %c16_i32_10 = arith.constant 16 : i32
    %38 = vector.broadcast %c16_i32_10 : i32 to vector<1x256xi32>
    %39 = arith.cmpi sge, %17, %38 : vector<1x256xi32>
    %c240_i32 = arith.constant 240 : i32
    %40 = vector.broadcast %c240_i32 : i32 to vector<1x256xi32>
    %41 = arith.cmpi slt, %17, %40 : vector<1x256xi32>
    %c0_11 = arith.constant 0 : index
    %c0_12 = arith.constant 0 : index
    %42 = vector.load %arg2[%c0_11, %c0_12] : memref<8x72xf32, #tpu.memory_space<vmem>>, vector<8x72xf32>
    %c17_i32 = arith.constant 17 : i32
    %43 = tpu.dynamic_rotate %0 by %c17_i32 dim 1 : vector<8x256xf32>, i32 -> vector<8x256xf32>
    %44 = arith.andi %39, %35 : vector<1x256xi1>
    %cst = arith.constant 0.000000e+00 : f32
    %45 = vector.shape_cast %44 : vector<1x256xi1> to vector<1x256xi1>
    %46 = vector.broadcast %45 : vector<1x256xi1> to vector<8x256xi1>
    %47 = vector.broadcast %cst : f32 to vector<8x256xf32>
    %48 = arith.select %46, %43, %47 : vector<8x256xi1>, vector<8x256xf32>
    %c16_i32_13 = arith.constant 16 : i32
    %49 = tpu.dynamic_rotate %0 by %c16_i32_13 dim 1 : vector<8x256xf32>, i32 -> vector<8x256xf32>
    %cst_14 = arith.constant 0.000000e+00 : f32
    %50 = vector.shape_cast %39 : vector<1x256xi1> to vector<1x256xi1>
    %51 = vector.broadcast %50 : vector<1x256xi1> to vector<8x256xi1>
    %52 = vector.broadcast %cst_14 : f32 to vector<8x256xf32>
    %53 = arith.select %51, %49, %52 : vector<8x256xi1>, vector<8x256xf32>
    %c15_i32 = arith.constant 15 : i32
    %54 = tpu.dynamic_rotate %0 by %c15_i32 dim 1 : vector<8x256xf32>, i32 -> vector<8x256xf32>
    %55 = arith.andi %39, %37 : vector<1x256xi1>
    %cst_15 = arith.constant 0.000000e+00 : f32
    %56 = vector.shape_cast %55 : vector<1x256xi1> to vector<1x256xi1>
    %57 = vector.broadcast %56 : vector<1x256xi1> to vector<8x256xi1>
    %58 = vector.broadcast %cst_15 : f32 to vector<8x256xf32>
    %59 = arith.select %57, %54, %58 : vector<8x256xi1>, vector<8x256xf32>
    %c1_i32_16 = arith.constant 1 : i32
    %60 = tpu.dynamic_rotate %0 by %c1_i32_16 dim 1 : vector<8x256xf32>, i32 -> vector<8x256xf32>
    %cst_17 = arith.constant 0.000000e+00 : f32
    %61 = vector.shape_cast %35 : vector<1x256xi1> to vector<1x256xi1>
    %62 = vector.broadcast %61 : vector<1x256xi1> to vector<8x256xi1>
    %63 = vector.broadcast %cst_17 : f32 to vector<8x256xf32>
    %64 = arith.select %62, %60, %63 : vector<8x256xi1>, vector<8x256xf32>
    %c255_i32 = arith.constant 255 : i32
    %65 = tpu.dynamic_rotate %0 by %c255_i32 dim 1 : vector<8x256xf32>, i32 -> vector<8x256xf32>
    %cst_18 = arith.constant 0.000000e+00 : f32
    %66 = vector.shape_cast %37 : vector<1x256xi1> to vector<1x256xi1>
    %67 = vector.broadcast %66 : vector<1x256xi1> to vector<8x256xi1>
    %68 = vector.broadcast %cst_18 : f32 to vector<8x256xf32>
    %69 = arith.select %67, %65, %68 : vector<8x256xi1>, vector<8x256xf32>
    %c241_i32 = arith.constant 241 : i32
    %70 = tpu.dynamic_rotate %0 by %c241_i32 dim 1 : vector<8x256xf32>, i32 -> vector<8x256xf32>
    %71 = arith.andi %41, %35 : vector<1x256xi1>
    %cst_19 = arith.constant 0.000000e+00 : f32
    %72 = vector.shape_cast %71 : vector<1x256xi1> to vector<1x256xi1>
    %73 = vector.broadcast %72 : vector<1x256xi1> to vector<8x256xi1>
    %74 = vector.broadcast %cst_19 : f32 to vector<8x256xf32>
    %75 = arith.select %73, %70, %74 : vector<8x256xi1>, vector<8x256xf32>
    %c240_i32_20 = arith.constant 240 : i32
    %76 = tpu.dynamic_rotate %0 by %c240_i32_20 dim 1 : vector<8x256xf32>, i32 -> vector<8x256xf32>
    %cst_21 = arith.constant 0.000000e+00 : f32
    %77 = vector.shape_cast %41 : vector<1x256xi1> to vector<1x256xi1>
    %78 = vector.broadcast %77 : vector<1x256xi1> to vector<8x256xi1>
    %79 = vector.broadcast %cst_21 : f32 to vector<8x256xf32>
    %80 = arith.select %78, %76, %79 : vector<8x256xi1>, vector<8x256xf32>
    %c239_i32 = arith.constant 239 : i32
    %81 = tpu.dynamic_rotate %0 by %c239_i32 dim 1 : vector<8x256xf32>, i32 -> vector<8x256xf32>
    %82 = arith.andi %41, %37 : vector<1x256xi1>
    %cst_22 = arith.constant 0.000000e+00 : f32
    %83 = vector.shape_cast %82 : vector<1x256xi1> to vector<1x256xi1>
    %84 = vector.broadcast %83 : vector<1x256xi1> to vector<8x256xi1>
    %85 = vector.broadcast %cst_22 : f32 to vector<8x256xf32>
    %86 = arith.select %84, %81, %85 : vector<8x256xi1>, vector<8x256xf32>
    %87 = tpu.concatenate %48, %53, %59, %64, %0, %69, %75, %80, %86 in 0 : vector<8x256xf32>, vector<8x256xf32>, vector<8x256xf32>, vector<8x256xf32>, vector<8x256xf32>, vector<8x256xf32>, vector<8x256xf32>, vector<8x256xf32>, vector<8x256xf32> -> vector<72x256xf32>
    %cst_23 = arith.constant dense<0.000000e+00> : vector<8x256xf32>
    %88 = tpu.matmul %42, %87, %cst_23 {dimension_numbers = #tpu.dot_dimension_numbers<[1], [0], [0], [1], [0, 0, 1, 1], [], []>} : vector<8x72xf32>, vector<72x256xf32>, vector<8x256xf32> -> vector<8x256xf32>
    %cst_24 = arith.constant 0.000000e+00 : f32
    %89 = vector.broadcast %cst_24 : f32 to vector<8x256xf32>
    %90 = arith.cmpf oge, %88, %89 : vector<8x256xf32>
    %cst_25 = arith.constant 1.000000e-01 : f32
    %91 = vector.broadcast %cst_25 : f32 to vector<8x256xf32>
    %92 = arith.mulf %91, %88 : vector<8x256xf32>
    %93 = arith.select %90, %88, %92 : vector<8x256xi1>, vector<8x256xf32>
    %c0_26 = arith.constant 0 : index
    %c0_27 = arith.constant 0 : index
    %94 = vector.load %arg3[%c0_26, %c0_27] : memref<8x72xf32, #tpu.memory_space<vmem>>, vector<8x72xf32>
    %c17_i32_28 = arith.constant 17 : i32
    %95 = tpu.dynamic_rotate %93 by %c17_i32_28 dim 1 : vector<8x256xf32>, i32 -> vector<8x256xf32>
    %96 = arith.andi %39, %35 : vector<1x256xi1>
    %cst_29 = arith.constant 0.000000e+00 : f32
    %97 = vector.shape_cast %96 : vector<1x256xi1> to vector<1x256xi1>
    %98 = vector.broadcast %97 : vector<1x256xi1> to vector<8x256xi1>
    %99 = vector.broadcast %cst_29 : f32 to vector<8x256xf32>
    %100 = arith.select %98, %95, %99 : vector<8x256xi1>, vector<8x256xf32>
    %c16_i32_30 = arith.constant 16 : i32
    %101 = tpu.dynamic_rotate %93 by %c16_i32_30 dim 1 : vector<8x256xf32>, i32 -> vector<8x256xf32>
    %cst_31 = arith.constant 0.000000e+00 : f32
    %102 = vector.shape_cast %39 : vector<1x256xi1> to vector<1x256xi1>
    %103 = vector.broadcast %102 : vector<1x256xi1> to vector<8x256xi1>
    %104 = vector.broadcast %cst_31 : f32 to vector<8x256xf32>
    %105 = arith.select %103, %101, %104 : vector<8x256xi1>, vector<8x256xf32>
    %c15_i32_32 = arith.constant 15 : i32
    %106 = tpu.dynamic_rotate %93 by %c15_i32_32 dim 1 : vector<8x256xf32>, i32 -> vector<8x256xf32>
    %107 = arith.andi %39, %37 : vector<1x256xi1>
    %cst_33 = arith.constant 0.000000e+00 : f32
    %108 = vector.shape_cast %107 : vector<1x256xi1> to vector<1x256xi1>
    %109 = vector.broadcast %108 : vector<1x256xi1> to vector<8x256xi1>
    %110 = vector.broadcast %cst_33 : f32 to vector<8x256xf32>
    %111 = arith.select %109, %106, %110 : vector<8x256xi1>, vector<8x256xf32>
    %c1_i32_34 = arith.constant 1 : i32
    %112 = tpu.dynamic_rotate %93 by %c1_i32_34 dim 1 : vector<8x256xf32>, i32 -> vector<8x256xf32>
    %cst_35 = arith.constant 0.000000e+00 : f32
    %113 = vector.shape_cast %35 : vector<1x256xi1> to vector<1x256xi1>
    %114 = vector.broadcast %113 : vector<1x256xi1> to vector<8x256xi1>
    %115 = vector.broadcast %cst_35 : f32 to vector<8x256xf32>
    %116 = arith.select %114, %112, %115 : vector<8x256xi1>, vector<8x256xf32>
    %c255_i32_36 = arith.constant 255 : i32
    %117 = tpu.dynamic_rotate %93 by %c255_i32_36 dim 1 : vector<8x256xf32>, i32 -> vector<8x256xf32>
    %cst_37 = arith.constant 0.000000e+00 : f32
    %118 = vector.shape_cast %37 : vector<1x256xi1> to vector<1x256xi1>
    %119 = vector.broadcast %118 : vector<1x256xi1> to vector<8x256xi1>
    %120 = vector.broadcast %cst_37 : f32 to vector<8x256xf32>
    %121 = arith.select %119, %117, %120 : vector<8x256xi1>, vector<8x256xf32>
    %c241_i32_38 = arith.constant 241 : i32
    %122 = tpu.dynamic_rotate %93 by %c241_i32_38 dim 1 : vector<8x256xf32>, i32 -> vector<8x256xf32>
    %123 = arith.andi %41, %35 : vector<1x256xi1>
    %cst_39 = arith.constant 0.000000e+00 : f32
    %124 = vector.shape_cast %123 : vector<1x256xi1> to vector<1x256xi1>
    %125 = vector.broadcast %124 : vector<1x256xi1> to vector<8x256xi1>
    %126 = vector.broadcast %cst_39 : f32 to vector<8x256xf32>
    %127 = arith.select %125, %122, %126 : vector<8x256xi1>, vector<8x256xf32>
    %c240_i32_40 = arith.constant 240 : i32
    %128 = tpu.dynamic_rotate %93 by %c240_i32_40 dim 1 : vector<8x256xf32>, i32 -> vector<8x256xf32>
    %cst_41 = arith.constant 0.000000e+00 : f32
    %129 = vector.shape_cast %41 : vector<1x256xi1> to vector<1x256xi1>
    %130 = vector.broadcast %129 : vector<1x256xi1> to vector<8x256xi1>
    %131 = vector.broadcast %cst_41 : f32 to vector<8x256xf32>
    %132 = arith.select %130, %128, %131 : vector<8x256xi1>, vector<8x256xf32>
    %c239_i32_42 = arith.constant 239 : i32
    %133 = tpu.dynamic_rotate %93 by %c239_i32_42 dim 1 : vector<8x256xf32>, i32 -> vector<8x256xf32>
    %134 = arith.andi %41, %37 : vector<1x256xi1>
    %cst_43 = arith.constant 0.000000e+00 : f32
    %135 = vector.shape_cast %134 : vector<1x256xi1> to vector<1x256xi1>
    %136 = vector.broadcast %135 : vector<1x256xi1> to vector<8x256xi1>
    %137 = vector.broadcast %cst_43 : f32 to vector<8x256xf32>
    %138 = arith.select %136, %133, %137 : vector<8x256xi1>, vector<8x256xf32>
    %139 = tpu.concatenate %100, %105, %111, %116, %93, %121, %127, %132, %138 in 0 : vector<8x256xf32>, vector<8x256xf32>, vector<8x256xf32>, vector<8x256xf32>, vector<8x256xf32>, vector<8x256xf32>, vector<8x256xf32>, vector<8x256xf32>, vector<8x256xf32> -> vector<72x256xf32>
    %cst_44 = arith.constant dense<0.000000e+00> : vector<8x256xf32>
    %140 = tpu.matmul %94, %139, %cst_44 {dimension_numbers = #tpu.dot_dimension_numbers<[1], [0], [0], [1], [0, 0, 1, 1], [], []>} : vector<8x72xf32>, vector<72x256xf32>, vector<8x256xf32> -> vector<8x256xf32>
    %c0_45 = arith.constant 0 : index
    %c0_46 = arith.constant 0 : index
    %141 = vector.load %arg4[%c0_45, %c0_46] : memref<8x256xf32, #tpu.memory_space<vmem>>, vector<8x256xf32>
    tpu.vector_store %arg4[%c0_45, %c0_46], %140 {strides = array<i32>} : memref<8x256xf32, #tpu.memory_space<vmem>>, vector<8x256xf32>,
    return
  }
  func.func @transform_0(%arg0: i32) -> (i32, i32) {
    %c0_i32 = arith.constant 0 : i32
    %c0_i32_0 = arith.constant 0 : i32
    return %c0_i32, %arg0 : i32, i32
  }
  func.func @transform_1(%arg0: i32) -> (i32, i32) {
    %c0_i32 = arith.constant 0 : i32
    %c0_i32_0 = arith.constant 0 : i32
    %c0_i32_1 = arith.constant 0 : i32
    return %c0_i32, %c0_i32_0 : i32, i32
  }
  func.func @transform_2(%arg0: i32) -> (i32, i32) {
    %c0_i32 = arith.constant 0 : i32
    %c0_i32_0 = arith.constant 0 : i32
    %c0_i32_1 = arith.constant 0 : i32
    return %c0_i32, %c0_i32_0 : i32, i32
  }
  func.func @transform_3(%arg0: i32) -> (i32, i32) {
    %c0_i32 = arith.constant 0 : i32
    %c0_i32_0 = arith.constant 0 : i32
    return %c0_i32, %arg0 : i32, i32
  }
}

</mosaic_0001>

<llo_original>
// kernel: tpu_custom_call.1
$region0: #{tpu_custom_call.1}
  #allocation0 [shape = 'u32[]', space=smem, size = 0x4, offset = 0x4, fixed_abs, tag = 'smem constant byte address 0x4 - core index']
  #allocation1 [shape = 'u32[144,128]{1,0:T(1,128)}', space=vmem, size = 0x12000, scoped, tag = 'internal scratch']
  %s0 = inlined_call_operand.hbm [shape: f32[8,512], index: 0, kind: input, shape index: {}]
  %s1 = inlined_call_operand.hbm [shape: f32[8,72], index: 1, kind: input, shape index: {}]
  %s2 = inlined_call_operand.hbm [shape: f32[8,72], index: 2, kind: input, shape index: {}]
  %s3 = inlined_call_operand.hbm [shape: f32[8,512], index: 3, kind: output, shape index: {}]
  %s4 = sld [smem:[#allocation0]]
  $region57: #{tpu_custom_call.1} parent=0
    _
  %s6 = ssub.s32 1, %s4
  %s7 = scalar_select 0, %s6, %s4
  $region1: #{tpu_custom_call.1} parent=0
    #allocation2 [shape = 'u8[16384]{0}', space=vmem, size = 0x4000, scoped, tag = 'input window, operand 0']
    #allocation3 [shape = 's32[2]{0}', space=sflag, size = 0x8, scoped, tag = 'scoped memory for tpu_custom_call.1']
    #allocation4 [shape = 's32[2]{0}', space=sflag, size = 0x8, scoped, tag = 'scoped memory for tpu_custom_call.1']
    #allocation5 [shape = 'u8[4096]{0}', space=vmem, size = 0x1000, scoped, tag = 'input window, operand 1, single buffered']
    #allocation6 [shape = 's32[1]{0}', space=sflag, size = 0x4, scoped, tag = 'scoped memory for tpu_custom_call.1']
    #allocation7 [shape = 'u8[4096]{0}', space=vmem, size = 0x1000, scoped, tag = 'input window, operand 2, single buffered']
    #allocation8 [shape = 'u8[16384]{0}', space=vmem, size = 0x4000, scoped, tag = 'output window, operand 0']
    %8 = vsyncpa [#allocation3], 0
    %s9 = scalar_lea.sflag [#allocation3], 1
    %10 = vsyncpa %s9, 0
    %11 = vsyncpa [#allocation6], 0
    %12 = vsyncpa [#allocation4], 0
    %s13 = scalar_lea.sflag [#allocation4], 1
    %14 = vsyncpa %s13, 0
    loop: start=0, step=1, limit=4
    $region2: #{tpu_custom_call.1} parent=1 // loop_pre_header
      _
    $region3: #{tpu_custom_call.1} parent=1 // loop_header
      %s16 = sphi 0, %s20
      %p17 = scmp.ge.s32.totalorder %s16, 4
      %s26 = sphi 0, %s28
      %s29 = sphi 0, %s26
      %s30 = sphi 0, %s29
      %s46 = sphi 0, %s30
      %s50 = sphi 0, %s50
      %s52 = sphi 0, %s50
      %s53 = sphi 0, %s52
      %s67 = sphi 0, %s53
      %s71 = sphi 0, %s71
      %s73 = sphi 0, %s71
      %s74 = sphi 0, %s73
      %s88 = sphi 0, %s74
      %s94 = sphi 0, %s96
      %s97 = sphi 0, %s94
      %s98 = sphi 0, %s97
      %s114 = sphi 0, %s98
    $region4: #{tpu_custom_call.1} parent=1 // loop_header_branch
      %19 = sbr.rel (%p17) target = $region8
    $region5: #{tpu_custom_call.1} parent=1 // loop_body
      %s21 = ssub.s32 %s16, 1
      %s22 = ssub.s32 %s16, 2
      %s23 = sadd.s32 %s16, 1
      %s24 = ssub.s32 %s16, %s23
      %p25 = scmp.eq.s32.totalorder %s24, 0
      %s27 = sadd.s32 %s26, 1
      %s28 = scalar_select %p25, %s26, %s27
      %p31 = pneg %p25
      %p32 = scmp.eq.s32.totalorder %s16, 1
      %p33 = por %p31, %p32
      %p34 = scmp.ne.s32.totalorder %s26, %s29
      %p35 = scmp.eq.s32.totalorder %s16, 0
      %p36 = por %p34, %p35
      %p37 = scmp.ne.s32.totalorder %s26, %s29
      %p38 = scmp.eq.s32.totalorder %s21, 1
      %p39 = por %p37, %p38
      %p40 = scmp.ne.s32.totalorder %s29, %s30
      %p41 = scmp.eq.s32.totalorder %s21, 0
      %p42 = por %p40, %p41
      %p43 = scmp.ne.s32.totalorder %s29, %s30
      %p44 = scmp.eq.s32.totalorder %s22, 1
      %p45 = por %p43, %p44
      %p47 = scmp.ne.s32.totalorder %s30, %s46
      %p48 = scmp.eq.s32.totalorder %s22, 0
      %p49 = por %p47, %p48
      %s51 = sadd.s32 %s50, 1
      %p54 = scmp.eq.s32.totalorder %s16, 1
      %p55 = scmp.ne.s32.totalorder %s50, %s52
      %p56 = scmp.eq.s32.totalorder %s16, 0
      %p57 = por %p55, %p56
      %p58 = scmp.ne.s32.totalorder %s50, %s52
      %p59 = scmp.eq.s32.totalorder %s21, 1
      %p60 = por %p58, %p59
      %p61 = scmp.ne.s32.totalorder %s52, %s53
      %p62 = scmp.eq.s32.totalorder %s21, 0
      %p63 = por %p61, %p62
      %p64 = scmp.ne.s32.totalorder %s52, %s53
      %p65 = scmp.eq.s32.totalorder %s22, 1
      %p66 = por %p64, %p65
      %p68 = scmp.ne.s32.totalorder %s53, %s67
      %p69 = scmp.eq.s32.totalorder %s22, 0
      %p70 = por %p68, %p69
      %s72 = sadd.s32 %s71, 1
      %p75 = scmp.eq.s32.totalorder %s16, 1
      %p76 = scmp.ne.s32.totalorder %s71, %s73
      %p77 = scmp.eq.s32.totalorder %s16, 0
      %p78 = por %p76, %p77
      %p79 = scmp.ne.s32.totalorder %s71, %s73
      %p80 = scmp.eq.s32.totalorder %s21, 1
      %p81 = por %p79, %p80
      %p82 = scmp.ne.s32.totalorder %s73, %s74
      %p83 = scmp.eq.s32.totalorder %s21, 0
      %p84 = por %p82, %p83
      %p85 = scmp.ne.s32.totalorder %s73, %s74
      %p86 = scmp.eq.s32.totalorder %s22, 1
      %p87 = por %p85, %p86
      %p89 = scmp.ne.s32.totalorder %s74, %s88
      %p90 = scmp.eq.s32.totalorder %s22, 0
      %p91 = por %p89, %p90
      %s92 = ssub.s32 %s16, %s23
      %p93 = scmp.eq.s32.totalorder %s92, 0
      %s95 = sadd.s32 %s94, 1
      %s96 = scalar_select %p93, %s94, %s95
      %p99 = pneg %p93
      %p100 = scmp.eq.s32.totalorder %s16, 1
      %p101 = por %p99, %p100
      %p102 = scmp.ne.s32.totalorder %s94, %s97
      %p103 = scmp.eq.s32.totalorder %s16, 0
      %p104 = por %p102, %p103
      %p105 = scmp.ne.s32.totalorder %s94, %s97
      %p106 = scmp.eq.s32.totalorder %s21, 1
      %p107 = por %p105, %p106
      %p108 = scmp.ne.s32.totalorder %s97, %s98
      %p109 = scmp.eq.s32.totalorder %s21, 0
      %p110 = por %p108, %p109
      %p111 = scmp.ne.s32.totalorder %s97, %s98
      %p112 = scmp.eq.s32.totalorder %s22, 1
      %p113 = por %p111, %p112
      %p115 = scmp.ne.s32.totalorder %s98, %s114
      %p116 = scmp.eq.s32.totalorder %s22, 0
      %p117 = por %p115, %p116
      %p118 = scmp.le.s32.totalorder 1, %s16
      %p119 = scmp.lt.s32.totalorder %s16, 3
      %p120 = pnand %p118, %p119
      %p121 = pneg %p120
      // Predicated region
      $region9: #{tpu_custom_call.1} parent=5 // pred_check
        _
      $region10: #{tpu_custom_call.1} parent=5 // pred_check_branch
        %123 = sbr.rel (%p120) target = $region12
      $region11: #{tpu_custom_call.1} parent=5 // pred_region
        %s124 = ssub.s32 %s16, 1
        // Predicated region
        $region13: #{tpu_custom_call.1} parent=11 // pred_check
          %p125 = pneg %p63
        $region14: #{tpu_custom_call.1} parent=11 // pred_check_branch
          %127 = sbr.rel (%p125) target = $region16
        $region15: #{tpu_custom_call.1} parent=11 // pred_region
          %s129 = ssub.s32 128, 128
          %130 = vsyncadd [#allocation6], %s129
          %s132 = sshll.u32 [#allocation5], 4
          %s133 = int_to_ptr.vmem [resolvable:$true] %s132
          %135 = dma.hbm_to_vmem [thread:$0]  %s1, 128, %s133, [#allocation6]
        $region16: #{tpu_custom_call.1} parent=11 // pred_fallthru
          _
        // Predicated region
        $region17: #{tpu_custom_call.1} parent=11 // pred_check
          %p136 = pneg %p84
        $region18: #{tpu_custom_call.1} parent=11 // pred_check_branch
          %138 = sbr.rel (%p136) target = $region20
        $region19: #{tpu_custom_call.1} parent=11 // pred_region
          %s140 = ssub.s32 128, 128
          %141 = vsyncadd [#allocation6], %s140
          %s143 = sshll.u32 [#allocation7], 4
          %s144 = int_to_ptr.vmem [resolvable:$true] %s143
          %146 = dma.hbm_to_vmem [thread:$0]  %s2, 128, %s144, [#allocation6]
        $region20: #{tpu_custom_call.1} parent=11 // pred_fallthru
          _
      $region12: #{tpu_custom_call.1} parent=5 // pred_fallthru
        _
      %p147 = scmp.lt.s32.totalorder %s16, 2
      // Predicated region
      $region21: #{tpu_custom_call.1} parent=5 // pred_check
        %p148 = pneg %p147
      $region22: #{tpu_custom_call.1} parent=5 // pred_check_branch
        %150 = sbr.rel (%p148) target = $region24
      $region23: #{tpu_custom_call.1} parent=5 // pred_region
        // Predicated region
        $region25: #{tpu_custom_call.1} parent=23 // pred_check
          %p151 = pneg %p36
        $region26: #{tpu_custom_call.1} parent=23 // pred_check_branch
          %153 = sbr.rel (%p151) target = $region28
        $region27: #{tpu_custom_call.1} parent=23 // pred_region
          %s154 = sand.u32 %s26, 1
          %s155 = scalar_lea.sflag [#allocation3], %s154
          %s156 = sand.u32 %s26, 1
          %s157 = smul.addr %s156, 16
          %s158 = scalar_lea.vmem [#allocation2], %s157
          %s159 = smul.u32 2, %s16
          %s161 = ssub.s32 256, 256
          %162 = vsyncadd %s155, %s161
          %s163 = smul.addr %s159, 128
          %s164 = scalar_lea.hbm %s0, %s163
          %s166 = sshll.u32 %s158, 4
          %s167 = int_to_ptr.vmem [resolvable:$true] %s166
          %169 = dma.hbm_to_vmem [thread:$0]  %s164, 256, %s167, %s155
        $region28: #{tpu_custom_call.1} parent=23 // pred_fallthru
          _
      $region24: #{tpu_custom_call.1} parent=5 // pred_fallthru
        _
      %p170 = scmp.le.s32.totalorder 1, %s16
      %p171 = scmp.lt.s32.totalorder %s16, 3
      %p172 = pnand %p170, %p171
      %p173 = pneg %p172
      // Predicated region
      $region29: #{tpu_custom_call.1} parent=5 // pred_check
        _
      $region30: #{tpu_custom_call.1} parent=5 // pred_check_branch
        %175 = sbr.rel (%p172) target = $region32
      $region31: #{tpu_custom_call.1} parent=5 // pred_region
        %s176 = ssub.s32 %s16, 1
        %s177 = sand.u32 %s29, 1
        %s178 = scalar_lea.sflag [#allocation3], %s177
        %s179 = sand.u32 %s29, 1
        %s180 = smul.addr %s179, 16
        %s181 = scalar_lea.vmem [#allocation2], %s180
        // Predicated region
        $region33: #{tpu_custom_call.1} parent=31 // pred_check
          %p182 = pneg %p42
        $region34: #{tpu_custom_call.1} parent=31 // pred_check_branch
          %184 = sbr.rel (%p182) target = $region36
        $region35: #{tpu_custom_call.1} parent=31 // pred_region
          %185 = dma.done %s178, 256
        $region36: #{tpu_custom_call.1} parent=31 // pred_fallthru
          _
        // Predicated region
        $region37: #{tpu_custom_call.1} parent=31 // pred_check
          %p186 = pneg %p63
        $region38: #{tpu_custom_call.1} parent=31 // pred_check_branch
          %188 = sbr.rel (%p186) target = $region40
        $region39: #{tpu_custom_call.1} parent=31 // pred_region
          %189 = dma.done [#allocation6], 128
        $region40: #{tpu_custom_call.1} parent=31 // pred_fallthru
          _
        // Predicated region
        $region41: #{tpu_custom_call.1} parent=31 // pred_check
          %p190 = pneg %p84
        $region42: #{tpu_custom_call.1} parent=31 // pred_check_branch
          %192 = sbr.rel (%p190) target = $region44
        $region43: #{tpu_custom_call.1} parent=31 // pred_region
          %193 = dma.done [#allocation6], 128
        $region44: #{tpu_custom_call.1} parent=31 // pred_fallthru
          _
        %s194 = sand.u32 %s29, 1
        %s195 = scalar_lea.sflag [#allocation3], %s194
        %s196 = sand.u32 %s29, 1
        %s197 = smul.addr %s196, 16
        %s198 = scalar_lea.vmem [#allocation2], %s197
        %p199 = pneg %p42
        %p200 = pneg %p39
        %p201 = pneg %p63
        %p202 = pneg %p60
        %p203 = pneg %p84
        %p204 = pneg %p81
        %p205 = pneg %p110
        %p206 = pneg %p107
        %s207 = sand.u32 %s97, 1
        %s208 = scalar_lea.sflag [#allocation4], %s207
        %s209 = sand.u32 %s97, 1
        %s210 = smul.addr %s209, 16
        %s211 = scalar_lea.vmem [#allocation8], %s210
        %s212 = smul.u32 2, %s21
        %s213 = smul.u32 2, %s21
        %v214 = vld [vmem:[%s181] sm:$0xff]
        %v215 = vld [vmem:[%s181 + $0x8] sm:$0xff]
        %v216 = vlaneseq
        %v217 = vand.u32 %v216, 127
        %v218 = vadd.s32 %v217, 128
        %vm219 = vcmp.lt.s32.totalorder %v217, 0
        %v220 = vsub.s32 0, %v217
        %v221 = vsel %vm219, %v220, %v217
        %v222 = vshrl.u32 %v221, 8
        %v223 = vand.u32 %v221, 255
        %v224 = vsub.s32 0, %v223
        %v225 = vsel %vm219, %v224, %v223
        %vm226 = vcmp.lt.s32.totalorder %v218, 0
        %v227 = vsub.s32 0, %v218
        %v228 = vsel %vm226, %v227, %v218
        %v229 = vshrl.u32 %v228, 8
        %v230 = vand.u32 %v228, 255
        %v231 = vsub.s32 0, %v230
        %v232 = vsel %vm226, %v231, %v230
        %vm233 = vcmp.ne.s32.totalorder %v225, 0
        %vm234 = vcmp.ne.s32.totalorder %v232, 0
        %vm235 = vcmp.lt.s32.totalorder %v225, 0
        %vm236 = vcmp.lt.s32.totalorder %v232, 0
        %vm237 = vmand %vm235, %vm233
        %vm238 = vmand %vm236, %vm234
        %v239 = vadd.s32 %v225, 256
        %v240 = vadd.s32 %v232, 256
        %v241 = vsel %vm237, %v239, %v225
        %v242 = vsel %vm238, %v240, %v232
        %vm243 = vcmp.lt.s32.totalorder %v241, 0
        %v244 = vsub.s32 0, %v241
        %v245 = vsel %vm243, %v244, %v241
        %v246 = vshrl.u32 %v245, 4
        %v247 = vand.u32 %v245, 15
        %v248 = vsub.s32 0, %v247
        %v249 = vsel %vm243, %v248, %v247
        %vm250 = vcmp.lt.s32.totalorder %v242, 0
        %v251 = vsub.s32 0, %v242
        %v252 = vsel %vm250, %v251, %v242
        %v253 = vshrl.u32 %v252, 4
        %v254 = vand.u32 %v252, 15
        %v255 = vsub.s32 0, %v254
        %v256 = vsel %vm250, %v255, %v254
        %vm257 = vcmp.ne.s32.totalorder %v249, 0
        %vm258 = vcmp.ne.s32.totalorder %v256, 0
        %vm259 = vcmp.lt.s32.totalorder %v249, 0
        %vm260 = vcmp.lt.s32.totalorder %v256, 0
        %vm261 = vmand %vm259, %vm257
        %vm262 = vmand %vm260, %vm258
        %v263 = vadd.s32 %v249, 16
        %v264 = vadd.s32 %v256, 16
        %v265 = vsel %vm261, %v263, %v249
        %v266 = vsel %vm262, %v264, %v256
        %vm267 = vcmp.ge.s32.totalorder %v265, 1
        %vm268 = vcmp.ge.s32.totalorder %v266, 1
        %vm269 = vcmp.le.s32.totalorder %v265, 14
        %vm270 = vcmp.le.s32.totalorder %v266, 14
        %vm271 = vcmp.ge.s32.totalorder %v241, 16
        %vm272 = vcmp.ge.s32.totalorder %v242, 16
        %vm273 = vcmp.lt.s32.totalorder %v241, 240
        %vm274 = vcmp.lt.s32.totalorder %v242, 240
        %v275 = vld [vmem:[#allocation5] sm:$0xff]
        %276 = vrot.lane.b32.xlu0 %v214, 17
        %v277 = vpop.permute.xlu0 %276
        %278 = vrot.lane.b32.xlu0 %v215, 17
        %v279 = vpop.permute.xlu0 %278
        %vm280 = vcmp.lt.s32.totalorder %v217, 17
        %v281 = vsel %vm280, %v277, %v279
        %v282 = vsel %vm280, %v279, %v277
        %vm283 = vmand %vm271, %vm267
        %vm284 = vmand %vm272, %vm268
        %v285 = vsel %vm283, 1, 0
        %v286 = vsel %vm284, 1, 0
        %vm287 = vcmp.eq.s32.totalorder %v285, 1
        %vm288 = vcmp.eq.s32.totalorder %v286, 1
        %v289 = vsel %vm287, %v282, 0.0
        %v290 = vsel %vm288, %v281, 0.0
        %291 = vrot.lane.b32.xlu0 %v214, 16
        %v292 = vpop.permute.xlu0 %291
        %293 = vrot.lane.b32.xlu0 %v215, 16
        %v294 = vpop.permute.xlu0 %293
        %vm295 = vcmp.lt.s32.totalorder %v217, 16
        %v296 = vsel %vm295, %v292, %v294
        %v297 = vsel %vm295, %v294, %v292
        %v298 = vsel %vm271, 1, 0
        %v299 = vsel %vm272, 1, 0
        %vm300 = vcmp.eq.s32.totalorder %v298, 1
        %vm301 = vcmp.eq.s32.totalorder %v299, 1
        %v302 = vsel %vm300, %v297, 0.0
        %v303 = vsel %vm301, %v296, 0.0
        %304 = vrot.lane.b32.xlu0 %v214, 15
        %v305 = vpop.permute.xlu0 %304
        %306 = vrot.lane.b32.xlu0 %v215, 15
        %v307 = vpop.permute.xlu0 %306
        %vm308 = vcmp.lt.s32.totalorder %v217, 15
        %v309 = vsel %vm308, %v305, %v307
        %v310 = vsel %vm308, %v307, %v305
        %vm311 = vmand %vm271, %vm269
        %vm312 = vmand %vm272, %vm270
        %v313 = vsel %vm311, 1, 0
        %v314 = vsel %vm312, 1, 0
        %vm315 = vcmp.eq.s32.totalorder %v313, 1
        %vm316 = vcmp.eq.s32.totalorder %v314, 1
        %v317 = vsel %vm315, %v310, 0.0
        %v318 = vsel %vm316, %v309, 0.0
        %319 = vrot.lane.b32.xlu0 %v214, 1
        %v320 = vpop.permute.xlu0 %319
        %321 = vrot.lane.b32.xlu0 %v215, 1
        %v322 = vpop.permute.xlu0 %321
        %vm323 = vcmp.lt.s32.totalorder %v217, 1
        %v324 = vsel %vm323, %v320, %v322
        %v325 = vsel %vm323, %v322, %v320
        %v326 = vsel %vm267, 1, 0
        %v327 = vsel %vm268, 1, 0
        %vm328 = vcmp.eq.s32.totalorder %v326, 1
        %vm329 = vcmp.eq.s32.totalorder %v327, 1
        %v330 = vsel %vm328, %v325, 0.0
        %v331 = vsel %vm329, %v324, 0.0
        %332 = vrot.lane.b32.xlu0 %v214, 127
        %v333 = vpop.permute.xlu0 %332
        %334 = vrot.lane.b32.xlu0 %v215, 127
        %v335 = vpop.permute.xlu0 %334
        %vm336 = vcmp.lt.s32.totalorder %v217, 127
        %v337 = vsel %vm336, %v333, %v335
        %v338 = vsel %vm336, %v335, %v333
        %v339 = vsel %vm269, 1, 0
        %v340 = vsel %vm270, 1, 0
        %vm341 = vcmp.eq.s32.totalorder %v339, 1
        %vm342 = vcmp.eq.s32.totalorder %v340, 1
        %v343 = vsel %vm341, %v337, 0.0
        %v344 = vsel %vm342, %v338, 0.0
        %345 = vrot.lane.b32.xlu0 %v214, 113
        %v346 = vpop.permute.xlu0 %345
        %347 = vrot.lane.b32.xlu0 %v215, 113
        %v348 = vpop.permute.xlu0 %347
        %vm349 = vcmp.lt.s32.totalorder %v217, 113
        %v350 = vsel %vm349, %v346, %v348
        %v351 = vsel %vm349, %v348, %v346
        %vm352 = vmand %vm273, %vm267
        %vm353 = vmand %vm274, %vm268
        %v354 = vsel %vm352, 1, 0
        %v355 = vsel %vm353, 1, 0
        %vm356 = vcmp.eq.s32.totalorder %v354, 1
        %vm357 = vcmp.eq.s32.totalorder %v355, 1
        %v358 = vsel %vm356, %v350, 0.0
        %v359 = vsel %vm357, %v351, 0.0
        %360 = vrot.lane.b32.xlu0 %v214, 112
        %v361 = vpop.permute.xlu0 %360
        %362 = vrot.lane.b32.xlu0 %v215, 112
        %v363 = vpop.permute.xlu0 %362
        %vm364 = vcmp.lt.s32.totalorder %v217, 112
        %v365 = vsel %vm364, %v361, %v363
        %v366 = vsel %vm364, %v363, %v361
        %v367 = vsel %vm273, 1, 0
        %v368 = vsel %vm274, 1, 0
        %vm369 = vcmp.eq.s32.totalorder %v367, 1
        %vm370 = vcmp.eq.s32.totalorder %v368, 1
        %v371 = vsel %vm369, %v365, 0.0
        %v372 = vsel %vm370, %v366, 0.0
        %373 = vrot.lane.b32.xlu0 %v214, 111
        %v374 = vpop.permute.xlu0 %373
        %375 = vrot.lane.b32.xlu0 %v215, 111
        %v376 = vpop.permute.xlu0 %375
        %vm377 = vcmp.lt.s32.totalorder %v217, 111
        %v378 = vsel %vm377, %v374, %v376
        %v379 = vsel %vm377, %v376, %v374
        %vm380 = vmand %vm273, %vm269
        %vm381 = vmand %vm274, %vm270
        %v382 = vsel %vm380, 1, 0
        %v383 = vsel %vm381, 1, 0
        %vm384 = vcmp.eq.s32.totalorder %v382, 1
        %vm385 = vcmp.eq.s32.totalorder %v383, 1
        %v386 = vsel %vm384, %v378, 0.0
        %v387 = vsel %vm385, %v379, 0.0
        %vm388 = vcmask 588800
        %v390 = vsel %vm388, %v275, 0
        %392 = vmatprep.subr.mxu0 %v290
        %393 = vmatpush1.msra.mxu0 %v289
        %394 = vmatprep.subr.mxu0 %v303
        %395 = vmatpush1.msra.mxu0 %v302
        %396 = vmatprep.subr.mxu0 %v318
        %397 = vmatpush1.msra.mxu0 %v317
        %398 = vmatprep.subr.mxu0 %v331
        %399 = vmatpush1.msra.mxu0 %v330
        %400 = vmatprep.subr.mxu0 %v215
        %401 = vmatpush1.msra.mxu0 %v214
        %402 = vmatprep.subr.mxu0 %v344
        %403 = vmatpush1.msra.mxu0 %v343
        %404 = vmatprep.subr.mxu0 %v359
        %405 = vmatpush1.msra.mxu0 %v358
        %406 = vmatprep.subr.mxu0 %v372
        %407 = vmatpush1.msra.mxu0 %v371
        %408 = vmatprep.subr.mxu0 %v387
        %409 = vmatpush1.msra.mxu0 %v386
        %410 = vmatprep.subr.mxu0 0.0
        %411 = vmatpush1.msra.mxu0 0.0
        %412 = vmatprep.subr.mxu0 0.0
        %413 = vmatpush1.msra.mxu0 0.0
        %414 = vmatprep.subr.mxu0 0.0
        %415 = vmatpush1.msra.mxu0 0.0
        %416 = vmatprep.subr.mxu0 0.0
        %417 = vmatpush1.msra.mxu0 0.0
        %418 = vmatprep.subr.mxu0 0.0
        %419 = vmatpush1.msra.mxu0 0.0
        %420 = vmatprep.subr.mxu0 0.0
        %421 = vmatpush1.msra.mxu0 0.0
        %422 = vmatprep.subr.mxu0 0.0
        %423 = vmatpush1.msra.mxu0 0.0
        %424 = vmatprep.subr.mxu0 0.0
        %425 = vmatpush1.msra.mxu0 0.0
        %426 = vmatprep.subr.mxu0 0.0
        %427 = vmatpush1.msra.mxu0 0.0
        %428 = vmatprep.subr.mxu0 0.0
        %429 = vmatpush1.msra.mxu0 0.0
        %430 = vmatprep.subr.mxu0 0.0
        %431 = vmatpush1.msra.mxu0 0.0
        %432 = vmatprep.subr.mxu0 0.0
        %433 = vmatpush1.msra.mxu0 0.0
        %434 = vmatprep.subr.mxu0 0.0
        %435 = vmatpush1.msra.mxu0 0.0
        %436 = vmatprep.subr.mxu0 0.0
        %437 = vmatpush1.msra.mxu0 0.0
        %438 = vmatprep.subr.mxu0 0.0
        %439 = vmatpush1.msra.mxu0 0.0
        %440 = vmatprep.subr.mxu0 0.0
        %441 = vmatpush1.msra.mxu0 0.0
        %442 = vmatprep.subr.mxu0 0.0
        %443 = vmatpush1.msra.mxu0 0.0
        %444 = vmatprep.subr.mxu0 0.0
        %445 = vmatpush1.msra.mxu0 0.0
        %446 = vmatprep.subr.mxu0 0.0
        %447 = vmatpush1.msra.mxu0 0.0
        %448 = vmatprep.subr.mxu0 0.0
        %449 = vmatpush1.msra.mxu0 0.0
        %450 = vmatprep.subr.mxu0 0.0
        %451 = vmatpush1.msra.mxu0 0.0
        %452 = vmatprep.subr.mxu0 0.0
        %453 = vmatpush1.msra.mxu0 0.0
        %454 = vmatprep.subr.mxu0 0.0
        %455 = vmatpush1.msra.mxu0 0.0
        %456 = vmatprep.mubr.f32.mxu0 0.0
        %457 = vmatmul.mubr.f32.gmra.mrb[0].mxu0 %v390
        %v458 = vpop.f32.mrb[0].mxu0
        %v459 = vadd.f32 0.0, %v458
        %v460 = vpop.f32.mrb[0].mxu0
        %v461 = vadd.f32 0.0, %v460
        %462 = vdwg.mxu0
        %vm463 = vcmp.ge.f32.partialorder %v459, 0.0
        %vm464 = vcmp.ge.f32.partialorder %v461, 0.0
        %v465 = vmul.f32 %v459, 0.1
        %v466 = vmul.f32 %v461, 0.1
        %v467 = vsel %vm463, %v459, %v465
        %v468 = vsel %vm464, %v461, %v466
        %v469 = vld [vmem:[#allocation7] sm:$0xff]
        %470 = vrot.lane.b32.xlu0 %v467, 17
        %v471 = vpop.permute.xlu0 %470
        %472 = vrot.lane.b32.xlu0 %v468, 17
        %v473 = vpop.permute.xlu0 %472
        %v474 = vsel %vm280, %v471, %v473
        %v475 = vsel %vm280, %v473, %v471
        %v476 = vsel %vm287, %v475, 0.0
        %v477 = vsel %vm288, %v474, 0.0
        %478 = vrot.lane.b32.xlu0 %v467, 16
        %v479 = vpop.permute.xlu0 %478
        %480 = vrot.lane.b32.xlu0 %v468, 16
        %v481 = vpop.permute.xlu0 %480
        %v482 = vsel %vm295, %v479, %v481
        %v483 = vsel %vm295, %v481, %v479
        %v484 = vsel %vm300, %v483, 0.0
        %v485 = vsel %vm301, %v482, 0.0
        %486 = vrot.lane.b32.xlu0 %v467, 15
        %v487 = vpop.permute.xlu0 %486
        %488 = vrot.lane.b32.xlu0 %v468, 15
        %v489 = vpop.permute.xlu0 %488
        %v490 = vsel %vm308, %v487, %v489
        %v491 = vsel %vm308, %v489, %v487
        %v492 = vsel %vm315, %v491, 0.0
        %v493 = vsel %vm316, %v490, 0.0
        %494 = vrot.lane.b32.xlu0 %v467, 1
        %v495 = vpop.permute.xlu0 %494
        %496 = vrot.lane.b32.xlu0 %v468, 1
        %v497 = vpop.permute.xlu0 %496
        %v498 = vsel %vm323, %v495, %v497
        %v499 = vsel %vm323, %v497, %v495
        %v500 = vsel %vm328, %v499, 0.0
        %v501 = vsel %vm329, %v498, 0.0
        %502 = vrot.lane.b32.xlu0 %v467, 127
        %v503 = vpop.permute.xlu0 %502
        %504 = vrot.lane.b32.xlu0 %v468, 127
        %v505 = vpop.permute.xlu0 %504
        %v506 = vsel %vm336, %v503, %v505
        %v507 = vsel %vm336, %v505, %v503
        %v508 = vsel %vm341, %v506, 0.0
        %v509 = vsel %vm342, %v507, 0.0
        %510 = vrot.lane.b32.xlu0 %v467, 113
        %v511 = vpop.permute.xlu0 %510
        %512 = vrot.lane.b32.xlu0 %v468, 113
        %v513 = vpop.permute.xlu0 %512
        %v514 = vsel %vm349, %v511, %v513
        %v515 = vsel %vm349, %v513, %v511
        %v516 = vsel %vm356, %v514, 0.0
        %v517 = vsel %vm357, %v515, 0.0
        %518 = vrot.lane.b32.xlu0 %v467, 112
        %v519 = vpop.permute.xlu0 %518
        %520 = vrot.lane.b32.xlu0 %v468, 112
        %v521 = vpop.permute.xlu0 %520
        %v522 = vsel %vm364, %v519, %v521
        %v523 = vsel %vm364, %v521, %v519
        %v524 = vsel %vm369, %v522, 0.0
        %v525 = vsel %vm370, %v523, 0.0
        %526 = vrot.lane.b32.xlu0 %v467, 111
        %v527 = vpop.permute.xlu0 %526
        %528 = vrot.lane.b32.xlu0 %v468, 111
        %v529 = vpop.permute.xlu0 %528
        %v530 = vsel %vm377, %v527, %v529
        %v531 = vsel %vm377, %v529, %v527
        %v532 = vsel %vm384, %v530, 0.0
        %v533 = vsel %vm385, %v531, 0.0
        %v535 = vsel %vm388, %v469, 0
        %537 = vmatprep.subr.mxu0 %v477
        %538 = vmatpush1.msra.mxu0 %v476
        %539 = vmatprep.subr.mxu0 %v485
        %540 = vmatpush1.msra.mxu0 %v484
        %541 = vmatprep.subr.mxu0 %v493
        %542 = vmatpush1.msra.mxu0 %v492
        %543 = vmatprep.subr.mxu0 %v501
        %544 = vmatpush1.msra.mxu0 %v500
        %545 = vmatprep.subr.mxu0 %v468
        %546 = vmatpush1.msra.mxu0 %v467
        %547 = vmatprep.subr.mxu0 %v509
        %548 = vmatpush1.msra.mxu0 %v508
        %549 = vmatprep.subr.mxu0 %v517
        %550 = vmatpush1.msra.mxu0 %v516
        %551 = vmatprep.subr.mxu0 %v525
        %552 = vmatpush1.msra.mxu0 %v524
        %553 = vmatprep.subr.mxu0 %v533
        %554 = vmatpush1.msra.mxu0 %v532
        %555 = vmatprep.subr.mxu0 0.0
        %556 = vmatpush1.msra.mxu0 0.0
        %557 = vmatprep.subr.mxu0 0.0
        %558 = vmatpush1.msra.mxu0 0.0
        %559 = vmatprep.subr.mxu0 0.0
        %560 = vmatpush1.msra.mxu0 0.0
        %561 = vmatprep.subr.mxu0 0.0
        %562 = vmatpush1.msra.mxu0 0.0
        %563 = vmatprep.subr.mxu0 0.0
        %564 = vmatpush1.msra.mxu0 0.0
        %565 = vmatprep.subr.mxu0 0.0
        %566 = vmatpush1.msra.mxu0 0.0
        %567 = vmatprep.subr.mxu0 0.0
        %568 = vmatpush1.msra.mxu0 0.0
        %569 = vmatprep.subr.mxu0 0.0
        %570 = vmatpush1.msra.mxu0 0.0
        %571 = vmatprep.subr.mxu0 0.0
        %572 = vmatpush1.msra.mxu0 0.0
        %573 = vmatprep.subr.mxu0 0.0
        %574 = vmatpush1.msra.mxu0 0.0
        %575 = vmatprep.subr.mxu0 0.0
        %576 = vmatpush1.msra.mxu0 0.0
        %577 = vmatprep.subr.mxu0 0.0
        %578 = vmatpush1.msra.mxu0 0.0
        %579 = vmatprep.subr.mxu0 0.0
        %580 = vmatpush1.msra.mxu0 0.0
        %581 = vmatprep.subr.mxu0 0.0
        %582 = vmatpush1.msra.mxu0 0.0
        %583 = vmatprep.subr.mxu0 0.0
        %584 = vmatpush1.msra.mxu0 0.0
        %585 = vmatprep.subr.mxu0 0.0
        %586 = vmatpush1.msra.mxu0 0.0
        %587 = vmatprep.subr.mxu0 0.0
        %588 = vmatpush1.msra.mxu0 0.0
        %589 = vmatprep.subr.mxu0 0.0
        %590 = vmatpush1.msra.mxu0 0.0
        %591 = vmatprep.subr.mxu0 0.0
        %592 = vmatpush1.msra.mxu0 0.0
        %593 = vmatprep.subr.mxu0 0.0
        %594 = vmatpush1.msra.mxu0 0.0
        %595 = vmatprep.subr.mxu0 0.0
        %596 = vmatpush1.msra.mxu0 0.0
        %597 = vmatprep.subr.mxu0 0.0
        %598 = vmatpush1.msra.mxu0 0.0
        %599 = vmatprep.subr.mxu0 0.0
        %600 = vmatpush1.msra.mxu0 0.0
        %601 = vmatprep.mubr.f32.mxu0 0.0
        %602 = vmatmul.mubr.f32.gmra.mrb[0].mxu0 %v535
        %v603 = vpop.f32.mrb[0].mxu0
        %v604 = vadd.f32 0.0, %v603
        %v605 = vpop.f32.mrb[0].mxu0
        %v606 = vadd.f32 0.0, %v605
        %607 = vdwg.mxu0
        %608 = vst [vmem:[%s211] sm:$0xff] %v604
        %609 = vst [vmem:[%s211 + $0x8] sm:$0xff] %v606
        %s610 = sand.u32 %s97, 1
        %s611 = scalar_lea.sflag [#allocation4], %s610
        %s612 = sand.u32 %s97, 1
        %s613 = smul.addr %s612, 16
        %s614 = scalar_lea.vmem [#allocation8], %s613
        // Predicated region
        $region45: #{tpu_custom_call.1} parent=31 // pred_check
          %p615 = pneg %p107
        $region46: #{tpu_custom_call.1} parent=31 // pred_check_branch
          %617 = sbr.rel (%p615) target = $region48
        $region47: #{tpu_custom_call.1} parent=31 // pred_region
          %s618 = smul.u32 2, %s21
          %s620 = ssub.s32 256, 256
          %621 = vsyncadd %s611, %s620
          %s622 = smul.addr %s618, 128
          %s623 = scalar_lea.hbm %s3, %s622
          %s625 = sshll.u32 %s614, 4
          %s626 = int_to_ptr.vmem [resolvable:$true] %s625
          %628 = dma.vmem_to_hbm [thread:$0]  %s626, 256, %s623, %s611
        $region48: #{tpu_custom_call.1} parent=31 // pred_fallthru
          _
      $region32: #{tpu_custom_call.1} parent=5 // pred_fallthru
        _
      %p629 = scmp.le.s32.totalorder 2, %s16
      // Predicated region
      $region49: #{tpu_custom_call.1} parent=5 // pred_check
        %p630 = pneg %p629
      $region50: #{tpu_custom_call.1} parent=5 // pred_check_branch
        %632 = sbr.rel (%p630) target = $region52
      $region51: #{tpu_custom_call.1} parent=5 // pred_region
        %s633 = ssub.s32 %s16, 2
        // Predicated region
        $region53: #{tpu_custom_call.1} parent=51 // pred_check
          %p634 = pneg %p113
        $region54: #{tpu_custom_call.1} parent=51 // pred_check_branch
          %636 = sbr.rel (%p634) target = $region56
        $region55: #{tpu_custom_call.1} parent=51 // pred_region
          %s637 = sand.u32 %s98, 1
          %s638 = scalar_lea.sflag [#allocation4], %s637
          %s639 = sand.u32 %s98, 1
          %s640 = smul.addr %s639, 16
          %s641 = scalar_lea.vmem [#allocation8], %s640
          %642 = dma.done %s638, 256
        $region56: #{tpu_custom_call.1} parent=51 // pred_fallthru
          _
      $region52: #{tpu_custom_call.1} parent=5 // pred_fallthru
        _
    $region6: #{tpu_custom_call.1} parent=1 // loop_footer
      %s20 = sadd.s32 1, %s16
    $region7: #{tpu_custom_call.1} parent=1 // loop_footer_branch
      %15 = sbr.rel target = $region3
    $region8: #{tpu_custom_call.1} parent=1 // loop_exit
      _
    %643 = vsyncpa [#allocation3], 1
    %s644 = scalar_lea.sflag [#allocation3], 1
    %645 = vsyncpa %s644, 1
    %646 = vsyncpa [#allocation6], 1
    %647 = vsyncpa [#allocation4], 1
    %s648 = scalar_lea.sflag [#allocation4], 1
    %649 = vsyncpa %s648, 1

</llo_original>
